<compile_context>
chip_gen: v5e
topology: v5e:2x2
jax: 0.10.0
libtpu: 0.0.40
codegen_flags: <defaults>
</compile_context>

<pallas_src>
import functools

import jax
import jax.numpy as jnp
from jax import lax
from jax.experimental import pallas as pl
from jax.experimental.pallas import tpu as pltpu


def _round_up(x: int, m: int) -> int:
    return (x + m - 1) // m * m


def _nw_kernel(w_ref, q_ref, k_ref, v_ref, o_ref, m_sc, l_sc, acc_sc, *,
               n_kv: int, tile_kv: int):
    # w_ref: SMEM (1,) f32                      q_ref: VMEM (tile_q, 1) f32
    # k_ref, v_ref: VMEM (tile_q | 1, tile_kv)  native dtype (f32 or bf16)
    # o_ref: VMEM (tile_q, 1) f32               m/l/acc scratch: (tile_q, 1) f32
    ki = pl.program_id(1)

    @pl.when(ki == 0)
    def _():
        m_sc[...] = jnp.full_like(m_sc, -jnp.inf)
        l_sc[...] = jnp.zeros_like(l_sc)
        acc_sc[...] = jnp.zeros_like(acc_sc)

    w = w_ref[0]
    c = -0.5 * w * w                                 # scalar, folded once
    q = q_ref[...]                                   # (tile_q, 1)
    k = k_ref[...].astype(jnp.float32)               # upcast hidden under the DMA
    v = v_ref[...].astype(jnp.float32)

    d = q - k                                        # broadcasts over lanes/sublanes
    s = (d * d) * c                                  # <= 0 by construction

    if n_kv % tile_kv != 0:
        # Only the trailing kv block is partial; mask its out-of-range lanes.
        lane = ki * tile_kv + lax.broadcasted_iota(jnp.int32, s.shape, 1)
        valid = lane < n_kv
        s = jnp.where(valid, s, -jnp.inf)
        v = jnp.where(valid, v, 0.0)                 # avoid 0 * garbage(NaN/inf)

    # online (flash-style) softmax; normalization deferred to the final step
    m_prev = m_sc[...]
    m_new = jnp.maximum(m_prev, jnp.max(s, axis=1, keepdims=True))
    alpha = jnp.exp(m_prev - m_new)                  # exp(-inf) = 0 on first step
    p = jnp.exp(s - m_new)                           # masked lanes -> exp(-inf) = 0
    l_sc[...] = alpha * l_sc[...] + jnp.sum(p, axis=1, keepdims=True)
    acc_sc[...] = alpha * acc_sc[...] + jnp.sum(p * v, axis=1, keepdims=True)
    m_sc[...] = m_new

    @pl.when(ki == pl.num_programs(1) - 1)
    def _():
        # approx=False kept for the 1e-5 f32 tolerance; it's a (tile_q, 1) column.
        o_ref[...] = acc_sc[...] * pl.reciprocal(l_sc[...], approx=False)


def _vmem_plan():
    """(double-buffered K/V+temps budget, vmem_limit_bytes) per TPU generation."""
    budget, limit = 20 * 1024 * 1024, 48 * 1024 * 1024   # v7x-safe defaults
    try:
        cap = pltpu.get_tpu_info().vmem_capacity_bytes
        if cap >= 100 * 1024 * 1024:        # v5e / v6e: 128 MiB physical VMEM
            budget, limit = 24 * 1024 * 1024, 64 * 1024 * 1024
        else:                               # v7x: 64 MiB physical VMEM
            budget, limit = 20 * 1024 * 1024, 48 * 1024 * 1024
    except Exception:
        pass
    return budget, limit


def _choose_tiles(n_q, n_kv, kv_itemsize, kv_broadcast, budget):
    # f32-equivalent working-set bytes per (query row x kv element):
    #   streamed K+V, double-buffered (skipped on the broadcast fast path)
    #   + ~4 f32 intermediates of shape (tile_q, tile_kv) (d/scores, p, p*v, ...)
    stream = 0 if kv_broadcast else 2 * 2 * kv_itemsize
    per_cell = stream + 4 * 4
    n_q_r8 = _round_up(max(n_q, 1), 8)

    if 8 * n_kv * per_cell <= budget:
        tile_kv = n_kv                       # single kv tile (full-extent last dim)
    else:
        tile_kv = max(128, (budget // (8 * per_cell)) // 128 * 128)
        tile_kv = min(tile_kv, _round_up(n_kv, 128))

    tile_q = (budget // max(tile_kv * per_cell, 1)) // 8 * 8
    tile_q = int(max(8, min(tile_q, n_q_r8)))    # no fixed 1024-row cap
    return tile_q, int(tile_kv)


def nw_kernel_regression(queries, keys, values, w, *, tile_q=None, tile_kv=None):
    """queries: (n_q,); keys/values: (n_q, n_kv), or (n_kv,) / (1, n_kv) when all
    query rows share the same keys/values; w: (1,). Returns (n_q,) f32."""
    queries = jnp.asarray(queries)
    keys = jnp.asarray(keys)
    values = jnp.asarray(values)
    if keys.ndim == 1:
        keys = keys[None, :]
    if values.ndim == 1:
        values = values[None, :]
    assert keys.shape == values.shape

    n_q = queries.shape[0]
    n_kv = keys.shape[1]
    kv_broadcast = (keys.shape[0] == 1) and (n_q != 1)
    if not kv_broadcast:
        assert keys.shape[0] == n_q or n_q == 1
    kv_itemsize = jnp.dtype(keys.dtype).itemsize

    budget, vmem_limit = _vmem_plan()
    auto_q, auto_kv = _choose_tiles(n_q, n_kv, kv_itemsize, kv_broadcast, budget)
    if tile_q is None:
        tile_q = auto_q
    tile_q = max(8, _round_up(int(tile_q), 8))
    tile_q = min(tile_q, _round_up(n_q, 8))
    if tile_kv is None:
        tile_kv = auto_kv
    tile_kv = int(tile_kv)
    if tile_kv != n_kv:
        assert tile_kv % 128 == 0, "tile_kv must be a multiple of 128 or == n_kv"

    q2d = queries.astype(jnp.float32).reshape(n_q, 1)

    grid = (pl.cdiv(n_q, tile_q), pl.cdiv(n_kv, tile_kv))
    kv_rows = 1 if kv_broadcast else tile_q
    kv_map = (lambda i, k: (0, k)) if kv_broadcast else (lambda i, k: (i, k))

    out = pl.pallas_call(
        functools.partial(_nw_kernel, n_kv=n_kv, tile_kv=tile_kv),
        out_shape=jax.ShapeDtypeStruct((n_q, 1), jnp.float32),
        grid=grid,
        in_specs=[
            pl.BlockSpec(memory_space=pltpu.MemorySpace.SMEM),        # w scalar
            pl.BlockSpec((tile_q, 1), lambda i, k: (i, 0)),           # queries
            pl.BlockSpec((kv_rows, tile_kv), kv_map),                 # keys
            pl.BlockSpec((kv_rows, tile_kv), kv_map),                 # values
        ],
        out_specs=pl.BlockSpec((tile_q, 1), lambda i, k: (i, 0)),
        scratch_shapes=[pltpu.VMEM((tile_q, 1), jnp.float32)] * 3,    # m, l, acc
        compiler_params=pltpu.CompilerParams(
            dimension_semantics=("parallel", "arbitrary"),
            vmem_limit_bytes=int(vmem_limit),
        ),
    )(w.astype(jnp.float32).reshape(-1), q2d, keys, values)
    return out[:, 0]


def _f(x):
    return 2.0 * jnp.sin(x) + x ** 0.8


def _reference(queries, keys, values, w):
    n_q = queries.shape[0]
    n_kv = keys.shape[1]
    if keys.shape[0] == 1:
        keys = jnp.broadcast_to(keys, (n_q, n_kv))
        values = jnp.broadcast_to(values, (n_q, n_kv))
    q = jnp.repeat(queries, n_kv).reshape(n_q, n_kv)
    scores = -((q - keys.astype(jnp.float32)) * w[0]) ** 2 / 2.0
    attn = jax.nn.softmax(scores, axis=1)
    return jnp.sum(attn * values.astype(jnp.float32), axis=1)


if __name__ == "__main__":
    key = jax.random.PRNGKey(0)
    k_w, k_noise, k_xtrain, k_xk, k_yk = jax.random.split(key, 5)

    # shapes from the module spec: n_train = 50, x_test = arange(0, 5, 0.1) -> 50
    n_train = 50
    x_train = jnp.sort(jax.random.uniform(k_xtrain, (n_train,), dtype=jnp.float32) * 5.0)
    y_train = _f(x_train) + 0.5 * jax.random.normal(k_noise, (n_train,), dtype=jnp.float32)
    x_test = jnp.arange(50, dtype=jnp.float32) * 0.1
    n_test = x_test.shape[0]

    keys = jnp.tile(x_train, (n_test, 1))      # (n_test, n_train)
    values = jnp.tile(y_train, (n_test, 1))    # (n_test, n_train)
    queries = x_test                           # (n_test,)
    w = jax.random.uniform(k_w, (1,), dtype=jnp.float32)   # parameter init ~ U[0, 1)

    ref = _reference(queries, keys, values, w)

    # 1) general (n_q, n_kv) path, auto tiles (single kv tile, cdiv row grid, no padding)
    out = jax.block_until_ready(nw_kernel_regression(queries, keys, values, w))
    assert out.shape == (n_test,)
    assert jnp.allclose(out, ref, atol=1e-5, rtol=1e-5), (out, ref)

    # 2) multi-tile row grid with a partial q edge block (50 rows, tile_q=16)
    out_tiled = jax.block_until_ready(
        nw_kernel_regression(queries, keys, values, w, tile_q=16))
    assert jnp.allclose(out_tiled, ref, atol=1e-5, rtol=1e-5), (out_tiled, ref)

    # 3) broadcast shared-K/V fast path (keys/values passed once as (n_kv,))
    out_bc = jax.block_until_ready(
        nw_kernel_regression(queries, x_train, y_train, w))
    assert jnp.allclose(out_bc, ref, atol=1e-5, rtol=1e-5), (out_bc, ref)

    # 4) bf16 keys/values (halves HBM traffic; f32 math in-kernel)
    out_bf16 = jax.block_until_ready(
        nw_kernel_regression(queries, keys.astype(jnp.bfloat16),
                             values.astype(jnp.bfloat16), w))
    assert jnp.allclose(out_bf16, ref, atol=1e-1, rtol=1e-1), (out_bf16, ref)

    # 5) kv-split online-softmax path: partial trailing kv tile + partial q tile
    n_kv2 = 300
    xk = jax.random.uniform(k_xk, (n_kv2,), dtype=jnp.float32) * 5.0
    yk = _f(xk) + 0.5 * jax.random.normal(k_yk, (n_kv2,), dtype=jnp.float32)
    keys2 = jnp.tile(xk, (n_test, 1))
    values2 = jnp.tile(yk, (n_test, 1))
    ref2 = _reference(queries, keys2, values2, w)
    out2 = jax.block_until_ready(
        nw_kernel_regression(queries, keys2, values2, w, tile_q=16, tile_kv=128))
    assert jnp.allclose(out2, ref2, atol=1e-4, rtol=1e-4), (out2, ref2)

    print("KERNEL_OK")
</pallas_src>

<mosaic_0001>
module attributes {stable_mosaic.version = 11 : i64} {
  func.func @_nw_kernel(%arg0: i32, %arg1: i32, %arg2: memref<1xf32, #tpu.memory_space<smem>>, %arg3: memref<56x1xf32, #tpu.memory_space<vmem>>, %arg4: memref<56x50xf32, #tpu.memory_space<vmem>>, %arg5: memref<56x50xf32, #tpu.memory_space<vmem>>, %arg6: memref<56x1xf32, #tpu.memory_space<vmem>>, %arg7: memref<56x1xf32, #tpu.memory_space<vmem>>, %arg8: memref<56x1xf32, #tpu.memory_space<vmem>>, %arg9: memref<56x1xf32, #tpu.memory_space<vmem>>) attributes {dimension_semantics = [#tpu.dimension_semantics<parallel>, #tpu.dimension_semantics<arbitrary>], iteration_bounds = array<i64: 1, 1>, scalar_prefetch = 0 : i64, scratch_operands = 3 : i64, tpu.core_type = #tpu.core_type<tc>, window_params = [{transform_indices = @transform_0, window_bounds = array<i64: 1>}, {transform_indices = @transform_1, window_bounds = array<i64: 56, 1>}, {transform_indices = @transform_2, window_bounds = array<i64: 56, 50>}, {transform_indices = @transform_3, window_bounds = array<i64: 56, 50>}, {transform_indices = @transform_4, window_bounds = array<i64: 56, 1>}]} {
    %c0_i32 = arith.constant 0 : i32
    %0 = arith.cmpi eq, %arg1, %c0_i32 : i32
    %1 = arith.extui %0 : i1 to i32
    %c0_i32_0 = arith.constant 0 : i32
    %2 = arith.cmpi ne, %1, %c0_i32_0 : i32
    scf.if %2 {
      %cst_24 = arith.constant 0xFF800000 : f32
      %40 = vector.broadcast %cst_24 : f32 to vector<56x1xf32>
      %c0_25 = arith.constant 0 : index
      %c0_26 = arith.constant 0 : index
      %41 = vector.load %arg7[%c0_25, %c0_26] : memref<56x1xf32, #tpu.memory_space<vmem>>, vector<56x1xf32>
      tpu.vector_store %arg7[%c0_25, %c0_26], %40 {strides = array<i32>} : memref<56x1xf32, #tpu.memory_space<vmem>>, vector<56x1xf32>,
      %cst_27 = arith.constant 0.000000e+00 : f32
      %42 = vector.broadcast %cst_27 : f32 to vector<56x1xf32>
      %c0_28 = arith.constant 0 : index
      %c0_29 = arith.constant 0 : index
      %43 = vector.load %arg8[%c0_28, %c0_29] : memref<56x1xf32, #tpu.memory_space<vmem>>, vector<56x1xf32>
      tpu.vector_store %arg8[%c0_28, %c0_29], %42 {strides = array<i32>} : memref<56x1xf32, #tpu.memory_space<vmem>>, vector<56x1xf32>,
      %cst_30 = arith.constant 0.000000e+00 : f32
      %44 = vector.broadcast %cst_30 : f32 to vector<56x1xf32>
      %c0_31 = arith.constant 0 : index
      %c0_32 = arith.constant 0 : index
      %45 = vector.load %arg9[%c0_31, %c0_32] : memref<56x1xf32, #tpu.memory_space<vmem>>, vector<56x1xf32>
      tpu.vector_store %arg9[%c0_31, %c0_32], %44 {strides = array<i32>} : memref<56x1xf32, #tpu.memory_space<vmem>>, vector<56x1xf32>,
    } else {
    }
    %c0 = arith.constant 0 : index
    %3 = memref.load %arg2[%c0] : memref<1xf32, #tpu.memory_space<smem>>
    %cst = arith.constant -5.000000e-01 : f32
    %4 = arith.mulf %cst, %3 : f32
    %5 = arith.mulf %4, %3 : f32
    %c0_1 = arith.constant 0 : index
    %c0_2 = arith.constant 0 : index
    %6 = vector.load %arg3[%c0_1, %c0_2] : memref<56x1xf32, #tpu.memory_space<vmem>>, vector<56x1xf32>
    %c0_3 = arith.constant 0 : index
    %c0_4 = arith.constant 0 : index
    %7 = vector.load %arg4[%c0_3, %c0_4] : memref<56x50xf32, #tpu.memory_space<vmem>>, vector<56x50xf32>
    %c0_5 = arith.constant 0 : index
    %c0_6 = arith.constant 0 : index
    %8 = vector.load %arg5[%c0_5, %c0_6] : memref<56x50xf32, #tpu.memory_space<vmem>>, vector<56x50xf32>
    %9 = vector.broadcast %6 : vector<56x1xf32> to vector<56x50xf32>
    %10 = arith.subf %9, %7 : vector<56x50xf32>
    %11 = arith.mulf %10, %10 : vector<56x50xf32>
    %12 = vector.broadcast %5 : f32 to vector<56x50xf32>
    %13 = arith.mulf %11, %12 : vector<56x50xf32>
    %c0_7 = arith.constant 0 : index
    %c0_8 = arith.constant 0 : index
    %14 = vector.load %arg7[%c0_7, %c0_8] : memref<56x1xf32, #tpu.memory_space<vmem>>, vector<56x1xf32>
    %cst_9 = arith.constant dense<0xFF800000> : vector<56xf32>
    %15 = vector.multi_reduction <maximumf>, %13, %cst_9 [1] : vector<56x50xf32> to vector<56xf32>
    %16 = vector.shape_cast %15 : vector<56xf32> to vector<56x1xf32>
    %17 = arith.maximumf %14, %16 : vector<56x1xf32>
    %18 = arith.subf %14, %17 : vector<56x1xf32>
    %19 = math.exp %18 : vector<56x1xf32>
    %20 = vector.broadcast %17 : vector<56x1xf32> to vector<56x50xf32>
    %21 = arith.subf %13, %20 : vector<56x50xf32>
    %22 = math.exp %21 : vector<56x50xf32>
    %c0_10 = arith.constant 0 : index
    %c0_11 = arith.constant 0 : index
    %23 = vector.load %arg8[%c0_10, %c0_11] : memref<56x1xf32, #tpu.memory_space<vmem>>, vector<56x1xf32>
    %24 = arith.mulf %19, %23 : vector<56x1xf32>
    %cst_12 = arith.constant dense<0.000000e+00> : vector<56xf32>
    %25 = vector.multi_reduction <add>, %22, %cst_12 [1] : vector<56x50xf32> to vector<56xf32>
    %26 = vector.shape_cast %25 : vector<56xf32> to vector<56x1xf32>
    %27 = arith.addf %24, %26 : vector<56x1xf32>
    %c0_13 = arith.constant 0 : index
    %c0_14 = arith.constant 0 : index
    %28 = vector.load %arg8[%c0_13, %c0_14] : memref<56x1xf32, #tpu.memory_space<vmem>>, vector<56x1xf32>
    tpu.vector_store %arg8[%c0_13, %c0_14], %27 {strides = array<i32>} : memref<56x1xf32, #tpu.memory_space<vmem>>, vector<56x1xf32>,
    %c0_15 = arith.constant 0 : index
    %c0_16 = arith.constant 0 : index
    %29 = vector.load %arg9[%c0_15, %c0_16] : memref<56x1xf32, #tpu.memory_space<vmem>>, vector<56x1xf32>
    %30 = arith.mulf %19, %29 : vector<56x1xf32>
    %31 = arith.mulf %22, %8 : vector<56x50xf32>
    %cst_17 = arith.constant dense<0.000000e+00> : vector<56xf32>
    %32 = vector.multi_reduction <add>, %31, %cst_17 [1] : vector<56x50xf32> to vector<56xf32>
    %33 = vector.shape_cast %32 : vector<56xf32> to vector<56x1xf32>
    %34 = arith.addf %30, %33 : vector<56x1xf32>
    %c0_18 = arith.constant 0 : index
    %c0_19 = arith.constant 0 : index
    %35 = vector.load %arg9[%c0_18, %c0_19] : memref<56x1xf32, #tpu.memory_space<vmem>>, vector<56x1xf32>
    tpu.vector_store %arg9[%c0_18, %c0_19], %34 {strides = array<i32>} : memref<56x1xf32, #tpu.memory_space<vmem>>, vector<56x1xf32>,
    %c0_20 = arith.constant 0 : index
    %c0_21 = arith.constant 0 : index
    %36 = vector.load %arg7[%c0_20, %c0_21] : memref<56x1xf32, #tpu.memory_space<vmem>>, vector<56x1xf32>
    tpu.vector_store %arg7[%c0_20, %c0_21], %17 {strides = array<i32>} : memref<56x1xf32, #tpu.memory_space<vmem>>, vector<56x1xf32>,
    %c0_i32_22 = arith.constant 0 : i32
    %37 = arith.cmpi eq, %arg1, %c0_i32_22 : i32
    %38 = arith.extui %37 : i1 to i32
    %c0_i32_23 = arith.constant 0 : i32
    %39 = arith.cmpi ne, %38, %c0_i32_23 : i32
    scf.if %39 {
      %c0_24 = arith.constant 0 : index
      %c0_25 = arith.constant 0 : index
      %40 = vector.load %arg9[%c0_24, %c0_25] : memref<56x1xf32, #tpu.memory_space<vmem>>, vector<56x1xf32>
      %c0_26 = arith.constant 0 : index
      %c0_27 = arith.constant 0 : index
      %41 = vector.load %arg8[%c0_26, %c0_27] : memref<56x1xf32, #tpu.memory_space<vmem>>, vector<56x1xf32>
      %42 = tpu.reciprocal %41 : vector<56x1xf32> -> vector<56x1xf32>
      %43 = arith.mulf %40, %42 : vector<56x1xf32>
      %c0_28 = arith.constant 0 : index
      %c0_29 = arith.constant 0 : index
      %44 = vector.load %arg6[%c0_28, %c0_29] : memref<56x1xf32, #tpu.memory_space<vmem>>, vector<56x1xf32>
      tpu.vector_store %arg6[%c0_28, %c0_29], %43 {strides = array<i32>} : memref<56x1xf32, #tpu.memory_space<vmem>>, vector<56x1xf32>,
    } else {
    }
    return
  }
  func.func @transform_0(%arg0: i32, %arg1: i32) -> i32 {
    %c0_i32 = arith.constant 0 : i32
    %c0_i32_0 = arith.constant 0 : i32
    return %c0_i32 : i32
  }
  func.func @transform_1(%arg0: i32, %arg1: i32) -> (i32, i32) {
    %c0_i32 = arith.constant 0 : i32
    %c0_i32_0 = arith.constant 0 : i32
    return %arg0, %c0_i32 : i32, i32
  }
  func.func @transform_2(%arg0: i32, %arg1: i32) -> (i32, i32) {
    %c0_i32 = arith.constant 0 : i32
    return %arg0, %arg1 : i32, i32
  }
  func.func @transform_3(%arg0: i32, %arg1: i32) -> (i32, i32) {
    %c0_i32 = arith.constant 0 : i32
    return %arg0, %arg1 : i32, i32
  }
  func.func @transform_4(%arg0: i32, %arg1: i32) -> (i32, i32) {
    %c0_i32 = arith.constant 0 : i32
    %c0_i32_0 = arith.constant 0 : i32
    return %arg0, %c0_i32 : i32, i32
  }
}

</mosaic_0001>

<llo_original>
// kernel: tpu_custom_call.1
$region0: #{tpu_custom_call.1}
  #allocation0 [shape = 'u32[]', space=smem, size = 0x4, offset = 0x4, fixed_abs, tag = 'smem constant byte address 0x4 - core index']
  #allocation1 [shape = 'u32[72,128]{1,0:T(1,128)}', space=vmem, size = 0x9000, scoped, tag = 'internal scratch']
  #allocation2 [shape = 'f32[56,1]{1,0:T(8,128)}', space=vmem, size = 0x7000, scoped, tag = 'scratch operand']
  #allocation3 [shape = 'f32[56,1]{1,0:T(8,128)}', space=vmem, size = 0x7000, scoped, tag = 'scratch operand']
  #allocation4 [shape = 'f32[56,1]{1,0:T(8,128)}', space=vmem, size = 0x7000, scoped, tag = 'scratch operand']
  #allocation5 [shape = 'f32[1]{0:T(128)S(6)}', space=smem, size = 0x200, scoped, tag = 'scoped memory for tpu_custom_call.1']
  %s0 = inlined_call_operand.<no memory space> [shape: f32[1], index: 0, kind: input, shape index: {}]
  %s1 = inlined_call_operand.vmem [shape: f32[50,1], index: 1, kind: input, shape index: {}]
  %s2 = inlined_call_operand.vmem [shape: f32[50,50], index: 2, kind: input, shape index: {}]
  %s3 = inlined_call_operand.hbm [shape: f32[50,50], index: 3, kind: input, shape index: {}]
  %s4 = inlined_call_operand.vmem [shape: f32[50,1], index: 4, kind: output, shape index: {}]
  %s5 = sld [smem:[#allocation0]]
  $region38: #{tpu_custom_call.1} parent=0
    _
  %s7 = ssub.s32 1, %s5
  %s8 = scalar_select 0, %s7, %s5
  %9 = sst [smem:[#allocation5]] %s0
  $region1: #{tpu_custom_call.1} parent=0
    #allocation6 [shape = 'u8[28672]{0}', space=vmem, size = 0x7000, scoped, tag = 'input window, operand 3, single buffered']
    #allocation7 [shape = 's32[1]{0}', space=sflag, size = 0x4, scoped, tag = 'scoped memory for tpu_custom_call.1']
    %10 = vsyncpa [#allocation7], 0
    // Predicated region
    $region2: #{tpu_custom_call.1} parent=1 // pred_check
      _
    $region3: #{tpu_custom_call.1} parent=1 // pred_check_branch
      %12 = sbr.rel (0) target = $region5
    $region4: #{tpu_custom_call.1} parent=1 // pred_region
      _
    $region5: #{tpu_custom_call.1} parent=1 // pred_fallthru
      _
    // Predicated region
    $region6: #{tpu_custom_call.1} parent=1 // pred_check
      _
    $region7: #{tpu_custom_call.1} parent=1 // pred_check_branch
      %14 = sbr.rel (0) target = $region9
    $region8: #{tpu_custom_call.1} parent=1 // pred_region
      _
    $region9: #{tpu_custom_call.1} parent=1 // pred_fallthru
      _
    // Predicated region
    $region10: #{tpu_custom_call.1} parent=1 // pred_check
      _
    $region11: #{tpu_custom_call.1} parent=1 // pred_check_branch
      %16 = sbr.rel (0) target = $region13
    $region12: #{tpu_custom_call.1} parent=1 // pred_region
      _
    $region13: #{tpu_custom_call.1} parent=1 // pred_fallthru
      _
    // Predicated region
    $region14: #{tpu_custom_call.1} parent=1 // pred_check
      _
    $region15: #{tpu_custom_call.1} parent=1 // pred_check_branch
      %18 = sbr.rel (0) target = $region17
    $region16: #{tpu_custom_call.1} parent=1 // pred_region
      %20 = vsyncadd [#allocation7], 0
      %s21 = sshll.u32 %s3, 4
      %s22 = int_to_ptr.hbm [resolvable:$true] %s21
      %s23 = sshll.u32 [#allocation6], 4
      %s24 = int_to_ptr.vmem [resolvable:$true] %s23
      %29 = dma.hbm_to_vmem [thread:$0]  %s22, 896, %s24, [#allocation7], 128, 128, 8
    $region17: #{tpu_custom_call.1} parent=1 // pred_fallthru
      _
    // Predicated region
    $region18: #{tpu_custom_call.1} parent=1 // pred_check
      _
    $region19: #{tpu_custom_call.1} parent=1 // pred_check_branch
      %31 = sbr.rel (0) target = $region21
    $region20: #{tpu_custom_call.1} parent=1 // pred_region
      %33 = dma.done [#allocation7], 896
    $region21: #{tpu_custom_call.1} parent=1 // pred_fallthru
      _
    %p34 = scmp.eq.s32.totalorder 0, 0
    // Predicated region
    $region22: #{tpu_custom_call.1} parent=1 // pred_check
      %p35 = pneg %p34
    $region23: #{tpu_custom_call.1} parent=1 // pred_check_branch
      %37 = sbr.rel (%p35) target = $region25
    $region24: #{tpu_custom_call.1} parent=1 // pred_region
      %vm38 = vcmask 7168
      %39 = vst.msk [vmem:[#allocation2] sm:$0xff] %vm38, -inf
      %40 = vst.msk [vmem:[#allocation2 + $0x8] sm:$0xff] %vm38, -inf
      %41 = vst.msk [vmem:[#allocation2 + $0x10] sm:$0xff] %vm38, -inf
      %42 = vst.msk [vmem:[#allocation2 + $0x18] sm:$0xff] %vm38, -inf
      %43 = vst.msk [vmem:[#allocation2 + $0x20] sm:$0xff] %vm38, -inf
      %44 = vst.msk [vmem:[#allocation2 + $0x28] sm:$0xff] %vm38, -inf
      %45 = vst.msk [vmem:[#allocation2 + $0x30] sm:$0xff] %vm38, -inf
      %46 = vst.msk [vmem:[#allocation3] sm:$0xff] %vm38, 0.0
      %47 = vst.msk [vmem:[#allocation3 + $0x8] sm:$0xff] %vm38, 0.0
      %48 = vst.msk [vmem:[#allocation3 + $0x10] sm:$0xff] %vm38, 0.0
      %49 = vst.msk [vmem:[#allocation3 + $0x18] sm:$0xff] %vm38, 0.0
      %50 = vst.msk [vmem:[#allocation3 + $0x20] sm:$0xff] %vm38, 0.0
      %51 = vst.msk [vmem:[#allocation3 + $0x28] sm:$0xff] %vm38, 0.0
      %52 = vst.msk [vmem:[#allocation3 + $0x30] sm:$0xff] %vm38, 0.0
      %53 = vst.msk [vmem:[#allocation4] sm:$0xff] %vm38, 0.0
      %54 = vst.msk [vmem:[#allocation4 + $0x8] sm:$0xff] %vm38, 0.0
      %55 = vst.msk [vmem:[#allocation4 + $0x10] sm:$0xff] %vm38, 0.0
      %56 = vst.msk [vmem:[#allocation4 + $0x18] sm:$0xff] %vm38, 0.0
      %57 = vst.msk [vmem:[#allocation4 + $0x20] sm:$0xff] %vm38, 0.0
      %58 = vst.msk [vmem:[#allocation4 + $0x28] sm:$0xff] %vm38, 0.0
      %59 = vst.msk [vmem:[#allocation4 + $0x30] sm:$0xff] %vm38, 0.0
    $region25: #{tpu_custom_call.1} parent=1 // pred_fallthru
      _
    %s60 = sld [smem:[#allocation5]]
    %s61 = smul.f32 %s60, -0.5
    %s62 = smul.f32 %s61, %s60
    %v63 = vld [vmem:[%s1] sm:$0xff]
    %v64 = vld [vmem:[%s1 + $0x8] sm:$0xff]
    %v65 = vld [vmem:[%s1 + $0x10] sm:$0xff]
    %v66 = vld [vmem:[%s1 + $0x18] sm:$0xff]
    %v67 = vld [vmem:[%s1 + $0x20] sm:$0xff]
    %v68 = vld [vmem:[%s1 + $0x28] sm:$0xff]
    %v69 = vld [vmem:[%s1 + $0x30] sm:$0xff]
    %v70 = vld [vmem:[%s2] sm:$0xff]
    %v71 = vld [vmem:[%s2 + $0x8] sm:$0xff]
    %v72 = vld [vmem:[%s2 + $0x10] sm:$0xff]
    %v73 = vld [vmem:[%s2 + $0x18] sm:$0xff]
    %v74 = vld [vmem:[%s2 + $0x20] sm:$0xff]
    %v75 = vld [vmem:[%s2 + $0x28] sm:$0xff]
    %v76 = vld [vmem:[%s2 + $0x30] sm:$0xff]
    %v77 = vld [vmem:[#allocation6] sm:$0xff]
    %v78 = vld [vmem:[#allocation6 + $0x8] sm:$0xff]
    %v79 = vld [vmem:[#allocation6 + $0x10] sm:$0xff]
    %v80 = vld [vmem:[#allocation6 + $0x18] sm:$0xff]
    %v81 = vld [vmem:[#allocation6 + $0x20] sm:$0xff]
    %v82 = vld [vmem:[#allocation6 + $0x28] sm:$0xff]
    %v83 = vld [vmem:[#allocation6 + $0x30] sm:$0xff]
    %85 = vset.pattern.permute.xlu0 0
    %86 = vperm.xlu0 %85, %v63
    %v87 = vpop.permute.xlu0 %86
    %90 = vset.pattern.permute.xlu0 0
    %91 = vperm.xlu0 %90, %v64
    %v92 = vpop.permute.xlu0 %91
    %95 = vset.pattern.permute.xlu0 0
    %96 = vperm.xlu0 %95, %v65
    %v97 = vpop.permute.xlu0 %96
    %100 = vset.pattern.permute.xlu0 0
    %101 = vperm.xlu0 %100, %v66
    %v102 = vpop.permute.xlu0 %101
    %105 = vset.pattern.permute.xlu0 0
    %106 = vperm.xlu0 %105, %v67
    %v107 = vpop.permute.xlu0 %106
    %110 = vset.pattern.permute.xlu0 0
    %111 = vperm.xlu0 %110, %v68
    %v112 = vpop.permute.xlu0 %111
    %115 = vset.pattern.permute.xlu0 0
    %116 = vperm.xlu0 %115, %v69
    %v117 = vpop.permute.xlu0 %116
    %v119 = vsub.f32 %v87, %v70
    %v120 = vsub.f32 %v92, %v71
    %v121 = vsub.f32 %v97, %v72
    %v122 = vsub.f32 %v102, %v73
    %v123 = vsub.f32 %v107, %v74
    %v124 = vsub.f32 %v112, %v75
    %v125 = vsub.f32 %v117, %v76
    %v126 = vmul.f32 %v119, %v119
    %v127 = vmul.f32 %v120, %v120
    %v128 = vmul.f32 %v121, %v121
    %v129 = vmul.f32 %v122, %v122
    %v130 = vmul.f32 %v123, %v123
    %v131 = vmul.f32 %v124, %v124
    %v132 = vmul.f32 %v125, %v125
    %v133 = vstv %s62
    %v134 = vmul.f32 %v126, %v133
    %v135 = vmul.f32 %v127, %v133
    %v136 = vmul.f32 %v128, %v133
    %v137 = vmul.f32 %v129, %v133
    %v138 = vmul.f32 %v130, %v133
    %v139 = vmul.f32 %v131, %v133
    %v140 = vmul.f32 %v132, %v133
    %v141 = vld [vmem:[#allocation2] sm:$0xff]
    %v142 = vld [vmem:[#allocation2 + $0x8] sm:$0xff]
    %v143 = vld [vmem:[#allocation2 + $0x10] sm:$0xff]
    %v144 = vld [vmem:[#allocation2 + $0x18] sm:$0xff]
    %v145 = vld [vmem:[#allocation2 + $0x20] sm:$0xff]
    %v146 = vld [vmem:[#allocation2 + $0x28] sm:$0xff]
    %v147 = vld [vmem:[#allocation2 + $0x30] sm:$0xff]
    %vm148 = vcmask 408576
    %v149 = vsel %vm148, %v134, -inf
    %150 = vmax.xlane.f32.xlu0 %v149
    %v151 = vpop.xlane.xlu0 %150
    %v152 = vsel %vm148, %v135, -inf
    %153 = vmax.xlane.f32.xlu0 %v152
    %v154 = vpop.xlane.xlu0 %153
    %v155 = vsel %vm148, %v136, -inf
    %156 = vmax.xlane.f32.xlu0 %v155
    %v157 = vpop.xlane.xlu0 %156
    %v158 = vsel %vm148, %v137, -inf
    %159 = vmax.xlane.f32.xlu0 %v158
    %v160 = vpop.xlane.xlu0 %159
    %v161 = vsel %vm148, %v138, -inf
    %162 = vmax.xlane.f32.xlu0 %v161
    %v163 = vpop.xlane.xlu0 %162
    %v164 = vsel %vm148, %v139, -inf
    %165 = vmax.xlane.f32.xlu0 %v164
    %v166 = vpop.xlane.xlu0 %165
    %v167 = vsel %vm148, %v140, -inf
    %168 = vmax.xlane.f32.xlu0 %v167
    %v169 = vpop.xlane.xlu0 %168
    %v170 = vmax.f32 %v141, %v151
    %v171 = vmax.f32 %v142, %v154
    %v172 = vmax.f32 %v143, %v157
    %v173 = vmax.f32 %v144, %v160
    %v174 = vmax.f32 %v145, %v163
    %v175 = vmax.f32 %v146, %v166
    %v176 = vmax.f32 %v147, %v169
    %v177 = vsub.f32 %v141, %v170
    %v178 = vsub.f32 %v142, %v171
    %v179 = vsub.f32 %v143, %v172
    %v180 = vsub.f32 %v144, %v173
    %v181 = vsub.f32 %v145, %v174
    %v182 = vsub.f32 %v146, %v175
    %v183 = vsub.f32 %v147, %v176
    %v184 = vmul.f32 %v177, 1.442695
    %v185 = vpow.pop %v184
    %v186 = vmul.f32 %v178, 1.442695
    %v187 = vpow.pop %v186
    %v188 = vmul.f32 %v179, 1.442695
    %v189 = vpow.pop %v188
    %v190 = vmul.f32 %v180, 1.442695
    %v191 = vpow.pop %v190
    %v192 = vmul.f32 %v181, 1.442695
    %v193 = vpow.pop %v192
    %v194 = vmul.f32 %v182, 1.442695
    %v195 = vpow.pop %v194
    %v196 = vmul.f32 %v183, 1.442695
    %v197 = vpow.pop %v196
    %199 = vset.pattern.permute.xlu0 0
    %200 = vperm.xlu0 %199, %v170
    %v201 = vpop.permute.xlu0 %200
    %204 = vset.pattern.permute.xlu0 0
    %205 = vperm.xlu0 %204, %v171
    %v206 = vpop.permute.xlu0 %205
    %209 = vset.pattern.permute.xlu0 0
    %210 = vperm.xlu0 %209, %v172
    %v211 = vpop.permute.xlu0 %210
    %214 = vset.pattern.permute.xlu0 0
    %215 = vperm.xlu0 %214, %v173
    %v216 = vpop.permute.xlu0 %215
    %219 = vset.pattern.permute.xlu0 0
    %220 = vperm.xlu0 %219, %v174
    %v221 = vpop.permute.xlu0 %220
    %224 = vset.pattern.permute.xlu0 0
    %225 = vperm.xlu0 %224, %v175
    %v226 = vpop.permute.xlu0 %225
    %229 = vset.pattern.permute.xlu0 0
    %230 = vperm.xlu0 %229, %v176
    %v231 = vpop.permute.xlu0 %230
    %v233 = vsub.f32 %v134, %v201
    %v234 = vsub.f32 %v135, %v206
    %v235 = vsub.f32 %v136, %v211
    %v236 = vsub.f32 %v137, %v216
    %v237 = vsub.f32 %v138, %v221
    %v238 = vsub.f32 %v139, %v226
    %v239 = vsub.f32 %v140, %v231
    %v240 = vmul.f32 %v233, 1.442695
    %v241 = vpow.pop %v240
    %v242 = vmul.f32 %v234, 1.442695
    %v243 = vpow.pop %v242
    %v244 = vmul.f32 %v235, 1.442695
    %v245 = vpow.pop %v244
    %v246 = vmul.f32 %v236, 1.442695
    %v247 = vpow.pop %v246
    %v248 = vmul.f32 %v237, 1.442695
    %v249 = vpow.pop %v248
    %v250 = vmul.f32 %v238, 1.442695
    %v251 = vpow.pop %v250
    %v252 = vmul.f32 %v239, 1.442695
    %v253 = vpow.pop %v252
    %v254 = vld [vmem:[#allocation3] sm:$0xff]
    %v255 = vld [vmem:[#allocation3 + $0x8] sm:$0xff]
    %v256 = vld [vmem:[#allocation3 + $0x10] sm:$0xff]
    %v257 = vld [vmem:[#allocation3 + $0x18] sm:$0xff]
    %v258 = vld [vmem:[#allocation3 + $0x20] sm:$0xff]
    %v259 = vld [vmem:[#allocation3 + $0x28] sm:$0xff]
    %v260 = vld [vmem:[#allocation3 + $0x30] sm:$0xff]
    %v261 = vmul.f32 %v185, %v254
    %v262 = vmul.f32 %v187, %v255
    %v263 = vmul.f32 %v189, %v256
    %v264 = vmul.f32 %v191, %v257
    %v265 = vmul.f32 %v193, %v258
    %v266 = vmul.f32 %v195, %v259
    %v267 = vmul.f32 %v197, %v260
    %v268 = vsel %vm148, %v241, 0.0
    %269 = vadd.xlane.f32.xlu0 %v268
    %v270 = vpop.xlane.xlu0 %269
    %v271 = vsel %vm148, %v243, 0.0
    %272 = vadd.xlane.f32.xlu0 %v271
    %v273 = vpop.xlane.xlu0 %272
    %v274 = vsel %vm148, %v245, 0.0
    %275 = vadd.xlane.f32.xlu0 %v274
    %v276 = vpop.xlane.xlu0 %275
    %v277 = vsel %vm148, %v247, 0.0
    %278 = vadd.xlane.f32.xlu0 %v277
    %v279 = vpop.xlane.xlu0 %278
    %v280 = vsel %vm148, %v249, 0.0
    %281 = vadd.xlane.f32.xlu0 %v280
    %v282 = vpop.xlane.xlu0 %281
    %v283 = vsel %vm148, %v251, 0.0
    %284 = vadd.xlane.f32.xlu0 %v283
    %v285 = vpop.xlane.xlu0 %284
    %v286 = vsel %vm148, %v253, 0.0
    %287 = vadd.xlane.f32.xlu0 %v286
    %v288 = vpop.xlane.xlu0 %287
    %v289 = vadd.f32 %v261, %v270
    %v290 = vadd.f32 %v262, %v273
    %v291 = vadd.f32 %v263, %v276
    %v292 = vadd.f32 %v264, %v279
    %v293 = vadd.f32 %v265, %v282
    %v294 = vadd.f32 %v266, %v285
    %v295 = vadd.f32 %v267, %v288
    %vm296 = vcmask 7168
    %297 = vst.msk [vmem:[#allocation3] sm:$0xff] %vm296, %v289
    %298 = vst.msk [vmem:[#allocation3 + $0x8] sm:$0xff] %vm296, %v290
    %299 = vst.msk [vmem:[#allocation3 + $0x10] sm:$0xff] %vm296, %v291
    %300 = vst.msk [vmem:[#allocation3 + $0x18] sm:$0xff] %vm296, %v292
    %301 = vst.msk [vmem:[#allocation3 + $0x20] sm:$0xff] %vm296, %v293
    %302 = vst.msk [vmem:[#allocation3 + $0x28] sm:$0xff] %vm296, %v294
    %303 = vst.msk [vmem:[#allocation3 + $0x30] sm:$0xff] %vm296, %v295
    %v304 = vld [vmem:[#allocation4] sm:$0xff]
    %v305 = vld [vmem:[#allocation4 + $0x8] sm:$0xff]
    %v306 = vld [vmem:[#allocation4 + $0x10] sm:$0xff]
    %v307 = vld [vmem:[#allocation4 + $0x18] sm:$0xff]
    %v308 = vld [vmem:[#allocation4 + $0x20] sm:$0xff]
    %v309 = vld [vmem:[#allocation4 + $0x28] sm:$0xff]
    %v310 = vld [vmem:[#allocation4 + $0x30] sm:$0xff]
    %v311 = vmul.f32 %v185, %v304
    %v312 = vmul.f32 %v187, %v305
    %v313 = vmul.f32 %v189, %v306
    %v314 = vmul.f32 %v191, %v307
    %v315 = vmul.f32 %v193, %v308
    %v316 = vmul.f32 %v195, %v309
    %v317 = vmul.f32 %v197, %v310
    %v318 = vmul.f32 %v241, %v77
    %v319 = vmul.f32 %v243, %v78
    %v320 = vmul.f32 %v245, %v79
    %v321 = vmul.f32 %v247, %v80
    %v322 = vmul.f32 %v249, %v81
    %v323 = vmul.f32 %v251, %v82
    %v324 = vmul.f32 %v253, %v83
    %v325 = vsel %vm148, %v318, 0.0
    %326 = vadd.xlane.f32.xlu0 %v325
    %v327 = vpop.xlane.xlu0 %326
    %v328 = vsel %vm148, %v319, 0.0
    %329 = vadd.xlane.f32.xlu0 %v328
    %v330 = vpop.xlane.xlu0 %329
    %v331 = vsel %vm148, %v320, 0.0
    %332 = vadd.xlane.f32.xlu0 %v331
    %v333 = vpop.xlane.xlu0 %332
    %v334 = vsel %vm148, %v321, 0.0
    %335 = vadd.xlane.f32.xlu0 %v334
    %v336 = vpop.xlane.xlu0 %335
    %v337 = vsel %vm148, %v322, 0.0
    %338 = vadd.xlane.f32.xlu0 %v337
    %v339 = vpop.xlane.xlu0 %338
    %v340 = vsel %vm148, %v323, 0.0
    %341 = vadd.xlane.f32.xlu0 %v340
    %v342 = vpop.xlane.xlu0 %341
    %v343 = vsel %vm148, %v324, 0.0
    %344 = vadd.xlane.f32.xlu0 %v343
    %v345 = vpop.xlane.xlu0 %344
    %v346 = vadd.f32 %v311, %v327
    %v347 = vadd.f32 %v312, %v330
    %v348 = vadd.f32 %v313, %v333
    %v349 = vadd.f32 %v314, %v336
    %v350 = vadd.f32 %v315, %v339
    %v351 = vadd.f32 %v316, %v342
    %v352 = vadd.f32 %v317, %v345
    %353 = vst.msk [vmem:[#allocation4] sm:$0xff] %vm296, %v346
    %354 = vst.msk [vmem:[#allocation4 + $0x8] sm:$0xff] %vm296, %v347
    %355 = vst.msk [vmem:[#allocation4 + $0x10] sm:$0xff] %vm296, %v348
    %356 = vst.msk [vmem:[#allocation4 + $0x18] sm:$0xff] %vm296, %v349
    %357 = vst.msk [vmem:[#allocation4 + $0x20] sm:$0xff] %vm296, %v350
    %358 = vst.msk [vmem:[#allocation4 + $0x28] sm:$0xff] %vm296, %v351
    %359 = vst.msk [vmem:[#allocation4 + $0x30] sm:$0xff] %vm296, %v352
    %360 = vst.msk [vmem:[#allocation2] sm:$0xff] %vm296, %v170
    %361 = vst.msk [vmem:[#allocation2 + $0x8] sm:$0xff] %vm296, %v171
    %362 = vst.msk [vmem:[#allocation2 + $0x10] sm:$0xff] %vm296, %v172
    %363 = vst.msk [vmem:[#allocation2 + $0x18] sm:$0xff] %vm296, %v173
    %364 = vst.msk [vmem:[#allocation2 + $0x20] sm:$0xff] %vm296, %v174
    %365 = vst.msk [vmem:[#allocation2 + $0x28] sm:$0xff] %vm296, %v175
    %366 = vst.msk [vmem:[#allocation2 + $0x30] sm:$0xff] %vm296, %v176
    // Predicated region
    $region26: #{tpu_custom_call.1} parent=1 // pred_check
      %p367 = pneg %p34
    $region27: #{tpu_custom_call.1} parent=1 // pred_check_branch
      %369 = sbr.rel (%p367) target = $region29
    $region28: #{tpu_custom_call.1} parent=1 // pred_region
      %v370 = vld [vmem:[#allocation4] sm:$0xff]
      %v371 = vld [vmem:[#allocation4 + $0x8] sm:$0xff]
      %v372 = vld [vmem:[#allocation4 + $0x10] sm:$0xff]
      %v373 = vld [vmem:[#allocation4 + $0x18] sm:$0xff]
      %v374 = vld [vmem:[#allocation4 + $0x20] sm:$0xff]
      %v375 = vld [vmem:[#allocation4 + $0x28] sm:$0xff]
      %v376 = vld [vmem:[#allocation4 + $0x30] sm:$0xff]
      %v377 = vld [vmem:[#allocation3] sm:$0xff]
      %v378 = vld [vmem:[#allocation3 + $0x8] sm:$0xff]
      %v379 = vld [vmem:[#allocation3 + $0x10] sm:$0xff]
      %v380 = vld [vmem:[#allocation3 + $0x18] sm:$0xff]
      %v381 = vld [vmem:[#allocation3 + $0x20] sm:$0xff]
      %v382 = vld [vmem:[#allocation3 + $0x28] sm:$0xff]
      %v383 = vld [vmem:[#allocation3 + $0x30] sm:$0xff]
      %v384 = vrcp.pop %v377
      %v385 = vmul.f32 %v377, %v384
      %v386 = vsub.f32 1.0, %v385
      %v387 = vmul.f32 %v384, %v386
      %v388 = vadd.f32 %v384, %v387
      %vm389 = vweird.f32 %v377
      %vm390 = vweird.f32 %v384
      %vm391 = vmor %vm389, %vm390
      %v392 = vsel %vm391, %v384, %v388
      %v393 = vand.u32 2147483647, %v377
      %vm394 = vcmp.eq.f32.partialorder %v393, 8.507059e+37
      %v395 = vand.u32 %v377, 2147483648
      %v396 = vor.u32 1.1754944e-38, %v395
      %v397 = vsel %vm394, %v396, %v392
      %v398 = vrcp.pop %v378
      %v399 = vmul.f32 %v378, %v398
      %v400 = vsub.f32 1.0, %v399
      %v401 = vmul.f32 %v398, %v400
      %v402 = vadd.f32 %v398, %v401
      %vm403 = vweird.f32 %v378
      %vm404 = vweird.f32 %v398
      %vm405 = vmor %vm403, %vm404
      %v406 = vsel %vm405, %v398, %v402
      %v407 = vand.u32 2147483647, %v378
      %vm408 = vcmp.eq.f32.partialorder %v407, 8.507059e+37
      %v409 = vand.u32 %v378, 2147483648
      %v410 = vor.u32 1.1754944e-38, %v409
      %v411 = vsel %vm408, %v410, %v406
      %v412 = vrcp.pop %v379
      %v413 = vmul.f32 %v379, %v412
      %v414 = vsub.f32 1.0, %v413
      %v415 = vmul.f32 %v412, %v414
      %v416 = vadd.f32 %v412, %v415
      %vm417 = vweird.f32 %v379
      %vm418 = vweird.f32 %v412
      %vm419 = vmor %vm417, %vm418
      %v420 = vsel %vm419, %v412, %v416
      %v421 = vand.u32 2147483647, %v379
      %vm422 = vcmp.eq.f32.partialorder %v421, 8.507059e+37
      %v423 = vand.u32 %v379, 2147483648
      %v424 = vor.u32 1.1754944e-38, %v423
      %v425 = vsel %vm422, %v424, %v420
      %v426 = vrcp.pop %v380
      %v427 = vmul.f32 %v380, %v426
      %v428 = vsub.f32 1.0, %v427
      %v429 = vmul.f32 %v426, %v428
      %v430 = vadd.f32 %v426, %v429
      %vm431 = vweird.f32 %v380
      %vm432 = vweird.f32 %v426
      %vm433 = vmor %vm431, %vm432
      %v434 = vsel %vm433, %v426, %v430
      %v435 = vand.u32 2147483647, %v380
      %vm436 = vcmp.eq.f32.partialorder %v435, 8.507059e+37
      %v437 = vand.u32 %v380, 2147483648
      %v438 = vor.u32 1.1754944e-38, %v437
      %v439 = vsel %vm436, %v438, %v434
      %v440 = vrcp.pop %v381
      %v441 = vmul.f32 %v381, %v440
      %v442 = vsub.f32 1.0, %v441
      %v443 = vmul.f32 %v440, %v442
      %v444 = vadd.f32 %v440, %v443
      %vm445 = vweird.f32 %v381
      %vm446 = vweird.f32 %v440
      %vm447 = vmor %vm445, %vm446
      %v448 = vsel %vm447, %v440, %v444
      %v449 = vand.u32 2147483647, %v381
      %vm450 = vcmp.eq.f32.partialorder %v449, 8.507059e+37
      %v451 = vand.u32 %v381, 2147483648
      %v452 = vor.u32 1.1754944e-38, %v451
      %v453 = vsel %vm450, %v452, %v448
      %v454 = vrcp.pop %v382
      %v455 = vmul.f32 %v382, %v454
      %v456 = vsub.f32 1.0, %v455
      %v457 = vmul.f32 %v454, %v456
      %v458 = vadd.f32 %v454, %v457
      %vm459 = vweird.f32 %v382
      %vm460 = vweird.f32 %v454
      %vm461 = vmor %vm459, %vm460
      %v462 = vsel %vm461, %v454, %v458
      %v463 = vand.u32 2147483647, %v382
      %vm464 = vcmp.eq.f32.partialorder %v463, 8.507059e+37
      %v465 = vand.u32 %v382, 2147483648
      %v466 = vor.u32 1.1754944e-38, %v465
      %v467 = vsel %vm464, %v466, %v462
      %v468 = vrcp.pop %v383
      %v469 = vmul.f32 %v383, %v468
      %v470 = vsub.f32 1.0, %v469
      %v471 = vmul.f32 %v468, %v470
      %v472 = vadd.f32 %v468, %v471
      %vm473 = vweird.f32 %v383
      %vm474 = vweird.f32 %v468
      %vm475 = vmor %vm473, %vm474
      %v476 = vsel %vm475, %v468, %v472
      %v477 = vand.u32 2147483647, %v383
      %vm478 = vcmp.eq.f32.partialorder %v477, 8.507059e+37
      %v479 = vand.u32 %v383, 2147483648
      %v480 = vor.u32 1.1754944e-38, %v479
      %v481 = vsel %vm478, %v480, %v476
      %v482 = vmul.f32 %v370, %v397
      %v483 = vmul.f32 %v371, %v411
      %v484 = vmul.f32 %v372, %v425
      %v485 = vmul.f32 %v373, %v439
      %v486 = vmul.f32 %v374, %v453
      %v487 = vmul.f32 %v375, %v467
      %v488 = vmul.f32 %v376, %v481
      %489 = vst.msk [vmem:[%s4] sm:$0xff] %vm296, %v482
      %490 = vst.msk [vmem:[%s4 + $0x8] sm:$0xff] %vm296, %v483
      %491 = vst.msk [vmem:[%s4 + $0x10] sm:$0xff] %vm296, %v484
      %492 = vst.msk [vmem:[%s4 + $0x18] sm:$0xff] %vm296, %v485
      %493 = vst.msk [vmem:[%s4 + $0x20] sm:$0xff] %vm296, %v486
      %494 = vst.msk [vmem:[%s4 + $0x28] sm:$0xff] %vm296, %v487
      %495 = vst.msk [vmem:[%s4 + $0x30] sm:$0xff] %vm296, %v488
    $region29: #{tpu_custom_call.1} parent=1 // pred_fallthru
      _
    // Predicated region
    $region30: #{tpu_custom_call.1} parent=1 // pred_check
      _
    $region31: #{tpu_custom_call.1} parent=1 // pred_check_branch
      %497 = sbr.rel (0) target = $region33
    $region32: #{tpu_custom_call.1} parent=1 // pred_region
      _
    $region33: #{tpu_custom_call.1} parent=1 // pred_fallthru
      _
    // Predicated region
    $region34: #{tpu_custom_call.1} parent=1 // pred_check
      _
    $region35: #{tpu_custom_call.1} parent=1 // pred_check_branch
      %499 = sbr.rel (0) target = $region37
    $region36: #{tpu_custom_call.1} parent=1 // pred_region
      _
    $region37: #{tpu_custom_call.1} parent=1 // pred_fallthru
      _
    %500 = vsyncpa [#allocation7], 1

</llo_original>
